<compile_context>
chip_gen: v5e
topology: v5e:2x2
jax: 0.10.0
libtpu: 0.0.40
codegen_flags: <defaults>
</compile_context>

<pallas_src>
import functools

import jax
import jax.numpy as jnp
from jax.experimental import pallas as pl
from jax.experimental.pallas import tpu as pltpu

LANE = 128          # TPU vreg lane width.


def _round_up(n, m):
    return ((n + m - 1) // m) * m


# ----------------------------------------------------------------------------
# Fused kernel: q-MLP, latent_q+softmax, p-MLP, latent_p+softmax.
# ----------------------------------------------------------------------------
def _masked_softmax(z, valid_n):
    """Numerically-stable softmax over the first `valid_n` lanes of z."""
    lane = jax.lax.broadcasted_iota(jnp.int32, z.shape, dimension=1)
    z = jnp.where(lane < valid_n, z, -jnp.inf)           # kill padded lanes
    z = z - jnp.max(z, axis=-1, keepdims=True)
    e = jnp.exp(z)                                        # EUP
    s = jnp.sum(e, axis=-1, keepdims=True)                # XLU reduce (>= 1.0)
    r = pl.reciprocal(s, approx=True)                     # EUP vrcp (free slot)
    r = r * (2.0 - s * r)                                 # 1 Newton step
    return e * r


def _encoder_kernel(x_ref, c_ref, w_in_ref, w_hid_ref, b_ref,
                    aq_ref, ap_ref, hp_ref, xc_scr,
                    *, latent_size, x_dim):
    """w_in_ref : (2, x_dim+c_dim, 128) bf16  [0]=wq0 (combined), [1]=wp0 at
                   row offset x_dim (x-rows are zero).
       w_hid_ref: (4, 128, 128) bf16  [0]=wq1 [1]=latent_q [2]=wp1 [3]=latent_p
       b_ref    : (8, 128) f32  rows 0..5 = bq0,bq1,bql,bp0,bp1,bpl
    """
    f32 = jnp.float32
    bf16 = jnp.bfloat16

    # torch.cat((x, c)) folded into a narrow VMEM scratch (no 128-lane pad,
    # no wrapper round trip).
    xc_scr[:, :x_dim] = x_ref[...]
    xc_scr[:, x_dim:] = c_ref[...]
    xc = xc_scr[...].astype(bf16)                         # (tb, 48) bf16

    # ---- q branch ----------------------------------------------------------
    hq = jnp.maximum(
        jnp.dot(xc, w_in_ref[0], preferred_element_type=f32) + b_ref[0:1, :],
        0.0)
    hq = jnp.maximum(
        jnp.dot(hq.astype(bf16), w_hid_ref[0],
                preferred_element_type=f32) + b_ref[1:2, :],
        0.0)
    zq = (jnp.dot(hq.astype(bf16), w_hid_ref[1],
                  preferred_element_type=f32) + b_ref[2:3, :])
    aq_ref[...] = _masked_softmax(zq, latent_size)[:, :latent_size]

    # ---- p branch (same combined input; x-rows of w_in[1] are zero) --------
    hp = jnp.maximum(
        jnp.dot(xc, w_in_ref[1], preferred_element_type=f32) + b_ref[3:4, :],
        0.0)
    hp = jnp.maximum(
        jnp.dot(hp.astype(bf16), w_hid_ref[2],
                preferred_element_type=f32) + b_ref[4:5, :],
        0.0)
    hp_ref[...] = hp[:, :hp_ref.shape[1]]
    zp = (jnp.dot(hp.astype(bf16), w_hid_ref[3],
                  preferred_element_type=f32) + b_ref[5:6, :])
    ap_ref[...] = _masked_softmax(zp, latent_size)[:, :latent_size]


# ----------------------------------------------------------------------------
# Parameter init (PyTorch-style) and packing into lane-padded bf16 slabs.
# ----------------------------------------------------------------------------
def init_linear_params(key, in_size, out_size):
    kw, kb = jax.random.split(key)
    bound = 1.0 / jnp.sqrt(jnp.float32(in_size))
    w = jax.random.uniform(kw, (in_size, out_size), jnp.float32, -bound, bound)
    b = jax.random.uniform(kb, (out_size,), jnp.float32, -bound, bound)
    return w, b


def init_encoder_params(key, layer_sizes_q, layer_sizes_p, latent_size,
                        num_labels):
    # conditional=True: first q layer sees x concatenated with labels,
    # first p layer sees labels only (mirrors the PyTorch __init__).
    layer_sizes_q = list(layer_sizes_q)
    layer_sizes_p = list(layer_sizes_p)
    layer_sizes_q[0] += num_labels
    layer_sizes_p[0] = num_labels

    keys = jax.random.split(key, len(layer_sizes_q) + len(layer_sizes_p))
    ki = 0
    params = {"mlp_q": [], "mlp_p": []}
    for in_s, out_s in zip(layer_sizes_q[:-1], layer_sizes_q[1:]):
        params["mlp_q"].append(init_linear_params(keys[ki], in_s, out_s))
        ki += 1
    for in_s, out_s in zip(layer_sizes_p[:-1], layer_sizes_p[1:]):
        params["mlp_p"].append(init_linear_params(keys[ki], in_s, out_s))
        ki += 1
    params["latent_q"] = init_linear_params(keys[ki], layer_sizes_q[-1],
                                            latent_size)
    ki += 1
    params["latent_p"] = init_linear_params(keys[ki], layer_sizes_p[-1],
                                            latent_size)
    return params


def pack_encoder_params(params, x_dim, latent_size):
    (wq0, bq0), (wq1, bq1) = params["mlp_q"]
    (wp0, bp0), (wp1, bp1) = params["mlp_p"]
    wql, bql = params["latent_q"]
    wpl, bpl = params["latent_p"]

    k_in = int(wq0.shape[0])                 # x_dim + num_labels
    c_dim = k_in - int(x_dim)
    assert wp0.shape[0] == c_dim
    for w, _ in [params["mlp_q"][0], params["mlp_q"][1], params["mlp_p"][0],
                 params["mlp_p"][1], params["latent_q"], params["latent_p"]]:
        assert w.shape[0] <= LANE and w.shape[1] <= LANE, (
            "packing assumes layer dims <= 128")

    def pad_to(w, rows, cols, row_off=0):
        out = jnp.zeros((rows, cols), jnp.float32)
        return out.at[row_off:row_off + w.shape[0], :w.shape[1]].set(w)

    # First-layer slab keyed by the combined [x|c] input (K = k_in).
    w_in = jnp.stack([
        pad_to(wq0, k_in, LANE),                     # combined -> h_q0
        pad_to(wp0, k_in, LANE, row_off=x_dim),      # combined -> h_p0
    ]).astype(jnp.bfloat16)                          # (2, k_in, 128)

    # Remaining layers consume the 128-lane-padded hidden activations.
    w_hid = jnp.stack([
        pad_to(wq1, LANE, LANE),                     # 0: q hidden
        pad_to(wql, LANE, LANE),                     # 1: latent_q
        pad_to(wp1, LANE, LANE),                     # 2: p hidden
        pad_to(wpl, LANE, LANE),                     # 3: latent_p
    ]).astype(jnp.bfloat16)                          # (4, 128, 128)

    b = jnp.zeros((8, LANE), jnp.float32)            # sublane-pad to 8
    for i, bb in enumerate([bq0, bq1, bql, bp0, bp1, bpl]):
        b = b.at[i, :bb.shape[0]].set(bb)

    return {"w_in": w_in, "w_hid": w_hid, "b": b,
            "x_dim": int(x_dim), "k_in": k_in, "c_dim": c_dim,
            "latent_size": int(latent_size),
            "hidden_p_dim": int(wp1.shape[1])}


# ----------------------------------------------------------------------------
# Fused forward (single pallas_call, batch-tiled grid)
# ----------------------------------------------------------------------------
def encoder_forward(packed, x, c, *, max_batch_tile=2048):
    """Mirrors Encoder.forward(train=True, conditional=True, softmax)."""
    batch = x.shape[0]
    x_dim = packed["x_dim"]
    c_dim = packed["c_dim"]
    k_in = packed["k_in"]
    latent = packed["latent_size"]
    hid = packed["hidden_p_dim"]

    # Batch tiling: multiple of 8 sublanes; split into >= 2 grid steps when
    # the batch allows it so both v7x TensorCores get work.
    b8 = _round_up(batch, 8)
    if b8 > 8:
        tb = min(max_batch_tile, _round_up((b8 + 1) // 2, 8))
    else:
        tb = 8
    b_pad = _round_up(b8, tb)

    if b_pad != batch:
        x = jnp.pad(x, ((0, b_pad - batch), (0, 0)))
        c = jnp.pad(c, ((0, b_pad - batch), (0, 0)))

    # VMEM budget: 5 double-buffered activation streams (each <=128 lanes ->
    # one 128-lane tile per row), the combined-input scratch, the weight/bias
    # slabs, plus headroom for Mosaic-materialized intermediates.
    stream_bytes = 2 * 5 * tb * LANE * 4
    scratch_bytes = tb * LANE * 4
    weight_bytes = 2 * (packed["w_in"].nbytes + packed["w_hid"].nbytes
                        + packed["b"].nbytes)
    interm_bytes = 10 * tb * LANE * 4
    vmem_limit = int(min(max(stream_bytes + scratch_bytes + weight_bytes
                             + interm_bytes + (2 << 20), 8 << 20), 31 << 20))

    kernel = functools.partial(_encoder_kernel,
                               latent_size=latent, x_dim=x_dim)

    aq, ap, hp = pl.pallas_call(
        kernel,
        out_shape=(
            jax.ShapeDtypeStruct((b_pad, latent), jnp.float32),
            jax.ShapeDtypeStruct((b_pad, latent), jnp.float32),
            jax.ShapeDtypeStruct((b_pad, hid), jnp.float32),
        ),
        grid=(b_pad // tb,),
        in_specs=[
            pl.BlockSpec((tb, x_dim), lambda i: (i, 0)),
            pl.BlockSpec((tb, c_dim), lambda i: (i, 0)),
            pl.BlockSpec(packed["w_in"].shape, lambda i: (0, 0, 0)),
            pl.BlockSpec(packed["w_hid"].shape, lambda i: (0, 0, 0)),
            pl.BlockSpec(packed["b"].shape, lambda i: (0, 0)),
        ],
        out_specs=(
            pl.BlockSpec((tb, latent), lambda i: (i, 0)),
            pl.BlockSpec((tb, latent), lambda i: (i, 0)),
            pl.BlockSpec((tb, hid), lambda i: (i, 0)),
        ),
        scratch_shapes=[pltpu.VMEM((tb, k_in), jnp.float32)],
        compiler_params=pltpu.CompilerParams(
            dimension_semantics=("parallel",),
            vmem_limit_bytes=vmem_limit),
    )(x, c, packed["w_in"], packed["w_hid"], packed["b"])

    if b_pad != batch:
        aq, ap, hp = aq[:batch], ap[:batch], hp[:batch]
    return aq, ap, hp


# ----------------------------------------------------------------------------
# Pure-JAX (f32) reference for a sanity check
# ----------------------------------------------------------------------------
def encoder_forward_ref(params, x, c):
    def lin(h, w, b):
        return h @ w + b

    full_x = jnp.concatenate((x, c), axis=-1)
    for w, b in params["mlp_q"]:
        full_x = jax.nn.relu(lin(full_x, w, b))
    alpha_q = jax.nn.softmax(lin(full_x, *params["latent_q"]), axis=-1)

    hidden_p = c
    for w, b in params["mlp_p"]:
        hidden_p = jax.nn.relu(lin(hidden_p, w, b))
    alpha_p = jax.nn.softmax(lin(hidden_p, *params["latent_p"]), axis=-1)
    return alpha_q, alpha_p, hidden_p


# ----------------------------------------------------------------------------
if __name__ == "__main__":
    # Small shapes consistent with the module's forward.
    batch = 8
    x_dim = 32
    num_labels = 16
    layer_sizes_q = [x_dim, 64, 32]      # __init__ adds num_labels to [0]
    layer_sizes_p = [x_dim, 64, 32]      # __init__ overwrites [0] = num_labels
    latent_size = 16

    key = jax.random.PRNGKey(0)
    kparams, kx, kc = jax.random.split(key, 3)

    params = init_encoder_params(kparams, layer_sizes_q, layer_sizes_p,
                                 latent_size, num_labels)
    x = jax.random.normal(kx, (batch, x_dim), jnp.float32)
    labels = jax.random.randint(kc, (batch,), 0, num_labels)
    c = jax.nn.one_hot(labels, num_labels, dtype=jnp.float32)

    packed = pack_encoder_params(params, x_dim, latent_size)
    alpha_q, alpha_p, hidden_p = encoder_forward(packed, x, c)
    jax.block_until_ready((alpha_q, alpha_p, hidden_p))

    # Sanity check vs. pure-f32 reference (kernel matmuls run in bf16 with
    # f32 accumulation, so use a correspondingly loose tolerance).
    rq, rp, rh = encoder_forward_ref(params, x, c)
    assert alpha_q.shape == (batch, latent_size)
    assert alpha_p.shape == (batch, latent_size)
    assert hidden_p.shape == (batch, layer_sizes_p[-1])
    assert jnp.allclose(alpha_q, rq, atol=3e-2, rtol=3e-2)
    assert jnp.allclose(alpha_p, rp, atol=3e-2, rtol=3e-2)
    assert jnp.allclose(hidden_p, rh, atol=3e-2, rtol=3e-2)
    assert jnp.allclose(jnp.sum(alpha_q, axis=-1), 1.0, atol=1e-3)
    assert jnp.allclose(jnp.sum(alpha_p, axis=-1), 1.0, atol=1e-3)

    print("KERNEL_OK")
</pallas_src>

<mosaic_0001>
module attributes {stable_mosaic.version = 11 : i64} {
  func.func @_encoder_kernel(%arg0: i32, %arg1: memref<8x32xf32, #tpu.memory_space<vmem>>, %arg2: memref<8x16xf32, #tpu.memory_space<vmem>>, %arg3: memref<2x48x128xbf16, #tpu.memory_space<vmem>>, %arg4: memref<4x128x128xbf16, #tpu.memory_space<vmem>>, %arg5: memref<8x128xf32, #tpu.memory_space<vmem>>, %arg6: memref<8x16xf32, #tpu.memory_space<vmem>>, %arg7: memref<8x16xf32, #tpu.memory_space<vmem>>, %arg8: memref<8x32xf32, #tpu.memory_space<vmem>>, %arg9: memref<8x48xf32, #tpu.memory_space<vmem>>) attributes {dimension_semantics = [#tpu.dimension_semantics<parallel>], iteration_bounds = array<i64: 1>, scalar_prefetch = 0 : i64, scratch_operands = 1 : i64, tpu.core_type = #tpu.core_type<tc>, window_params = [{transform_indices = @transform_0, window_bounds = array<i64: 8, 32>}, {transform_indices = @transform_1, window_bounds = array<i64: 8, 16>}, {pipeline_mode = #tpu.pipeline_mode<synchronous>, transform_indices = @transform_2, window_bounds = array<i64: 2, 48, 128>}, {pipeline_mode = #tpu.pipeline_mode<synchronous>, transform_indices = @transform_3, window_bounds = array<i64: 4, 128, 128>}, {pipeline_mode = #tpu.pipeline_mode<synchronous>, transform_indices = @transform_4, window_bounds = array<i64: 8, 128>}, {transform_indices = @transform_5, window_bounds = array<i64: 8, 16>}, {transform_indices = @transform_6, window_bounds = array<i64: 8, 16>}, {transform_indices = @transform_7, window_bounds = array<i64: 8, 32>}]} {
    %c0 = arith.constant 0 : index
    %c0_0 = arith.constant 0 : index
    %0 = vector.load %arg1[%c0, %c0_0] : memref<8x32xf32, #tpu.memory_space<vmem>>, vector<8x32xf32>
    %c0_1 = arith.constant 0 : index
    %c0_2 = arith.constant 0 : index
    %1 = vector.load %arg9[%c0_1, %c0_2] : memref<8x48xf32, #tpu.memory_space<vmem>>, vector<8x32xf32>
    tpu.vector_store %arg9[%c0_1, %c0_2], %0 {strides = array<i32>} : memref<8x48xf32, #tpu.memory_space<vmem>>, vector<8x32xf32>,
    %c0_3 = arith.constant 0 : index
    %c0_4 = arith.constant 0 : index
    %2 = vector.load %arg2[%c0_3, %c0_4] : memref<8x16xf32, #tpu.memory_space<vmem>>, vector<8x16xf32>
    %c0_5 = arith.constant 0 : index
    %c32 = arith.constant 32 : index
    %3 = vector.load %arg9[%c0_5, %c32] : memref<8x48xf32, #tpu.memory_space<vmem>>, vector<8x16xf32>
    tpu.vector_store %arg9[%c0_5, %c32], %2 {strides = array<i32>} : memref<8x48xf32, #tpu.memory_space<vmem>>, vector<8x16xf32>,
    %c0_6 = arith.constant 0 : index
    %c0_7 = arith.constant 0 : index
    %4 = vector.load %arg9[%c0_6, %c0_7] : memref<8x48xf32, #tpu.memory_space<vmem>>, vector<8x48xf32>
    %5 = arith.truncf %4 : vector<8x48xf32> to vector<8x48xbf16>
    %c0_8 = arith.constant 0 : index
    %c0_9 = arith.constant 0 : index
    %c0_10 = arith.constant 0 : index
    %6 = vector.load %arg3[%c0_8, %c0_9, %c0_10] : memref<2x48x128xbf16, #tpu.memory_space<vmem>>, vector<1x48x128xbf16>
    %7 = vector.shape_cast %6 : vector<1x48x128xbf16> to vector<48x128xbf16>
    %cst = arith.constant dense<0.000000e+00> : vector<8x128xf32>
    %8 = tpu.matmul %5, %7, %cst {dimension_numbers = #tpu.dot_dimension_numbers<[1], [0], [0], [1], [0, 0, 1, 1], [], []>} : vector<8x48xbf16>, vector<48x128xbf16>, vector<8x128xf32> -> vector<8x128xf32>
    %c0_11 = arith.constant 0 : index
    %c0_12 = arith.constant 0 : index
    %9 = vector.load %arg5[%c0_11, %c0_12] : memref<8x128xf32, #tpu.memory_space<vmem>>, vector<1x128xf32>
    %10 = vector.broadcast %9 : vector<1x128xf32> to vector<8x128xf32>
    %11 = arith.addf %8, %10 : vector<8x128xf32>
    %cst_13 = arith.constant 0.000000e+00 : f32
    %12 = vector.broadcast %cst_13 : f32 to vector<8x128xf32>
    %13 = arith.maximumf %11, %12 : vector<8x128xf32>
    %14 = arith.truncf %13 : vector<8x128xf32> to vector<8x128xbf16>
    %c0_14 = arith.constant 0 : index
    %c0_15 = arith.constant 0 : index
    %c0_16 = arith.constant 0 : index
    %15 = vector.load %arg4[%c0_14, %c0_15, %c0_16] : memref<4x128x128xbf16, #tpu.memory_space<vmem>>, vector<1x128x128xbf16>
    %16 = vector.shape_cast %15 : vector<1x128x128xbf16> to vector<128x128xbf16>
    %cst_17 = arith.constant dense<0.000000e+00> : vector<8x128xf32>
    %17 = tpu.matmul %14, %16, %cst_17 {dimension_numbers = #tpu.dot_dimension_numbers<[1], [0], [0], [1], [0, 0, 1, 1], [], []>} : vector<8x128xbf16>, vector<128x128xbf16>, vector<8x128xf32> -> vector<8x128xf32>
    %c1 = arith.constant 1 : index
    %c0_18 = arith.constant 0 : index
    %18 = vector.load %arg5[%c1, %c0_18] : memref<8x128xf32, #tpu.memory_space<vmem>>, vector<1x128xf32>
    %19 = vector.broadcast %18 : vector<1x128xf32> to vector<8x128xf32>
    %20 = arith.addf %17, %19 : vector<8x128xf32>
    %cst_19 = arith.constant 0.000000e+00 : f32
    %21 = vector.broadcast %cst_19 : f32 to vector<8x128xf32>
    %22 = arith.maximumf %20, %21 : vector<8x128xf32>
    %23 = arith.truncf %22 : vector<8x128xf32> to vector<8x128xbf16>
    %c1_20 = arith.constant 1 : index
    %c0_21 = arith.constant 0 : index
    %c0_22 = arith.constant 0 : index
    %24 = vector.load %arg4[%c1_20, %c0_21, %c0_22] : memref<4x128x128xbf16, #tpu.memory_space<vmem>>, vector<1x128x128xbf16>
    %25 = vector.shape_cast %24 : vector<1x128x128xbf16> to vector<128x128xbf16>
    %cst_23 = arith.constant dense<0.000000e+00> : vector<8x128xf32>
    %26 = tpu.matmul %23, %25, %cst_23 {dimension_numbers = #tpu.dot_dimension_numbers<[1], [0], [0], [1], [0, 0, 1, 1], [], []>} : vector<8x128xbf16>, vector<128x128xbf16>, vector<8x128xf32> -> vector<8x128xf32>
    %c2 = arith.constant 2 : index
    %c0_24 = arith.constant 0 : index
    %27 = vector.load %arg5[%c2, %c0_24] : memref<8x128xf32, #tpu.memory_space<vmem>>, vector<1x128xf32>
    %28 = vector.broadcast %27 : vector<1x128xf32> to vector<8x128xf32>
    %29 = arith.addf %26, %28 : vector<8x128xf32>
    %30 = tpu.iota {dimensions = array<i32: 1>} : vector<8x128xi32>
    %c16_i32 = arith.constant 16 : i32
    %31 = vector.broadcast %c16_i32 : i32 to vector<8x128xi32>
    %32 = arith.cmpi slt, %30, %31 : vector<8x128xi32>
    %cst_25 = arith.constant 0xFF800000 : f32
    %33 = vector.broadcast %cst_25 : f32 to vector<8x128xf32>
    %34 = arith.select %32, %29, %33 : vector<8x128xi1>, vector<8x128xf32>
    %cst_26 = arith.constant dense<0xFF800000> : vector<8xf32>
    %35 = vector.multi_reduction <maximumf>, %34, %cst_26 [1] : vector<8x128xf32> to vector<8xf32>
    %36 = vector.shape_cast %35 : vector<8xf32> to vector<8x1xf32>
    %37 = vector.broadcast %36 : vector<8x1xf32> to vector<8x128xf32>
    %38 = arith.subf %34, %37 : vector<8x128xf32>
    %39 = math.exp %38 : vector<8x128xf32>
    %cst_27 = arith.constant dense<0.000000e+00> : vector<8xf32>
    %40 = vector.multi_reduction <add>, %39, %cst_27 [1] : vector<8x128xf32> to vector<8xf32>
    %41 = vector.shape_cast %40 : vector<8xf32> to vector<8x1xf32>
    %42 = tpu.reciprocal %41 {approx = true} : vector<8x1xf32> -> vector<8x1xf32>
    %43 = arith.mulf %41, %42 : vector<8x1xf32>
    %cst_28 = arith.constant 2.000000e+00 : f32
    %44 = vector.broadcast %cst_28 : f32 to vector<8x1xf32>
    %45 = arith.subf %44, %43 : vector<8x1xf32>
    %46 = arith.mulf %42, %45 : vector<8x1xf32>
    %47 = vector.broadcast %46 : vector<8x1xf32> to vector<8x128xf32>
    %48 = arith.mulf %39, %47 : vector<8x128xf32>
    %49 = vector.extract_strided_slice %48 {offsets = [0, 0], sizes = [8, 16], strides = [1, 1]} : vector<8x128xf32> to vector<8x16xf32>
    %c0_29 = arith.constant 0 : index
    %c0_30 = arith.constant 0 : index
    %50 = vector.load %arg6[%c0_29, %c0_30] : memref<8x16xf32, #tpu.memory_space<vmem>>, vector<8x16xf32>
    tpu.vector_store %arg6[%c0_29, %c0_30], %49 {strides = array<i32>} : memref<8x16xf32, #tpu.memory_space<vmem>>, vector<8x16xf32>,
    %c1_31 = arith.constant 1 : index
    %c0_32 = arith.constant 0 : index
    %c0_33 = arith.constant 0 : index
    %51 = vector.load %arg3[%c1_31, %c0_32, %c0_33] : memref<2x48x128xbf16, #tpu.memory_space<vmem>>, vector<1x48x128xbf16>
    %52 = vector.shape_cast %51 : vector<1x48x128xbf16> to vector<48x128xbf16>
    %cst_34 = arith.constant dense<0.000000e+00> : vector<8x128xf32>
    %53 = tpu.matmul %5, %52, %cst_34 {dimension_numbers = #tpu.dot_dimension_numbers<[1], [0], [0], [1], [0, 0, 1, 1], [], []>} : vector<8x48xbf16>, vector<48x128xbf16>, vector<8x128xf32> -> vector<8x128xf32>
    %c3 = arith.constant 3 : index
    %c0_35 = arith.constant 0 : index
    %54 = vector.load %arg5[%c3, %c0_35] : memref<8x128xf32, #tpu.memory_space<vmem>>, vector<1x128xf32>
    %55 = vector.broadcast %54 : vector<1x128xf32> to vector<8x128xf32>
    %56 = arith.addf %53, %55 : vector<8x128xf32>
    %cst_36 = arith.constant 0.000000e+00 : f32
    %57 = vector.broadcast %cst_36 : f32 to vector<8x128xf32>
    %58 = arith.maximumf %56, %57 : vector<8x128xf32>
    %59 = arith.truncf %58 : vector<8x128xf32> to vector<8x128xbf16>
    %c2_37 = arith.constant 2 : index
    %c0_38 = arith.constant 0 : index
    %c0_39 = arith.constant 0 : index
    %60 = vector.load %arg4[%c2_37, %c0_38, %c0_39] : memref<4x128x128xbf16, #tpu.memory_space<vmem>>, vector<1x128x128xbf16>
    %61 = vector.shape_cast %60 : vector<1x128x128xbf16> to vector<128x128xbf16>
    %cst_40 = arith.constant dense<0.000000e+00> : vector<8x128xf32>
    %62 = tpu.matmul %59, %61, %cst_40 {dimension_numbers = #tpu.dot_dimension_numbers<[1], [0], [0], [1], [0, 0, 1, 1], [], []>} : vector<8x128xbf16>, vector<128x128xbf16>, vector<8x128xf32> -> vector<8x128xf32>
    %c4 = arith.constant 4 : index
    %c0_41 = arith.constant 0 : index
    %63 = vector.load %arg5[%c4, %c0_41] : memref<8x128xf32, #tpu.memory_space<vmem>>, vector<1x128xf32>
    %64 = vector.broadcast %63 : vector<1x128xf32> to vector<8x128xf32>
    %65 = arith.addf %62, %64 : vector<8x128xf32>
    %cst_42 = arith.constant 0.000000e+00 : f32
    %66 = vector.broadcast %cst_42 : f32 to vector<8x128xf32>
    %67 = arith.maximumf %65, %66 : vector<8x128xf32>
    %68 = vector.extract_strided_slice %67 {offsets = [0, 0], sizes = [8, 32], strides = [1, 1]} : vector<8x128xf32> to vector<8x32xf32>
    %c0_43 = arith.constant 0 : index
    %c0_44 = arith.constant 0 : index
    %69 = vector.load %arg8[%c0_43, %c0_44] : memref<8x32xf32, #tpu.memory_space<vmem>>, vector<8x32xf32>
    tpu.vector_store %arg8[%c0_43, %c0_44], %68 {strides = array<i32>} : memref<8x32xf32, #tpu.memory_space<vmem>>, vector<8x32xf32>,
    %70 = arith.truncf %67 : vector<8x128xf32> to vector<8x128xbf16>
    %c3_45 = arith.constant 3 : index
    %c0_46 = arith.constant 0 : index
    %c0_47 = arith.constant 0 : index
    %71 = vector.load %arg4[%c3_45, %c0_46, %c0_47] : memref<4x128x128xbf16, #tpu.memory_space<vmem>>, vector<1x128x128xbf16>
    %72 = vector.shape_cast %71 : vector<1x128x128xbf16> to vector<128x128xbf16>
    %cst_48 = arith.constant dense<0.000000e+00> : vector<8x128xf32>
    %73 = tpu.matmul %70, %72, %cst_48 {dimension_numbers = #tpu.dot_dimension_numbers<[1], [0], [0], [1], [0, 0, 1, 1], [], []>} : vector<8x128xbf16>, vector<128x128xbf16>, vector<8x128xf32> -> vector<8x128xf32>
    %c5 = arith.constant 5 : index
    %c0_49 = arith.constant 0 : index
    %74 = vector.load %arg5[%c5, %c0_49] : memref<8x128xf32, #tpu.memory_space<vmem>>, vector<1x128xf32>
    %75 = vector.broadcast %74 : vector<1x128xf32> to vector<8x128xf32>
    %76 = arith.addf %73, %75 : vector<8x128xf32>
    %77 = tpu.iota {dimensions = array<i32: 1>} : vector<8x128xi32>
    %c16_i32_50 = arith.constant 16 : i32
    %78 = vector.broadcast %c16_i32_50 : i32 to vector<8x128xi32>
    %79 = arith.cmpi slt, %77, %78 : vector<8x128xi32>
    %cst_51 = arith.constant 0xFF800000 : f32
    %80 = vector.broadcast %cst_51 : f32 to vector<8x128xf32>
    %81 = arith.select %79, %76, %80 : vector<8x128xi1>, vector<8x128xf32>
    %cst_52 = arith.constant dense<0xFF800000> : vector<8xf32>
    %82 = vector.multi_reduction <maximumf>, %81, %cst_52 [1] : vector<8x128xf32> to vector<8xf32>
    %83 = vector.shape_cast %82 : vector<8xf32> to vector<8x1xf32>
    %84 = vector.broadcast %83 : vector<8x1xf32> to vector<8x128xf32>
    %85 = arith.subf %81, %84 : vector<8x128xf32>
    %86 = math.exp %85 : vector<8x128xf32>
    %cst_53 = arith.constant dense<0.000000e+00> : vector<8xf32>
    %87 = vector.multi_reduction <add>, %86, %cst_53 [1] : vector<8x128xf32> to vector<8xf32>
    %88 = vector.shape_cast %87 : vector<8xf32> to vector<8x1xf32>
    %89 = tpu.reciprocal %88 {approx = true} : vector<8x1xf32> -> vector<8x1xf32>
    %90 = arith.mulf %88, %89 : vector<8x1xf32>
    %cst_54 = arith.constant 2.000000e+00 : f32
    %91 = vector.broadcast %cst_54 : f32 to vector<8x1xf32>
    %92 = arith.subf %91, %90 : vector<8x1xf32>
    %93 = arith.mulf %89, %92 : vector<8x1xf32>
    %94 = vector.broadcast %93 : vector<8x1xf32> to vector<8x128xf32>
    %95 = arith.mulf %86, %94 : vector<8x128xf32>
    %96 = vector.extract_strided_slice %95 {offsets = [0, 0], sizes = [8, 16], strides = [1, 1]} : vector<8x128xf32> to vector<8x16xf32>
    %c0_55 = arith.constant 0 : index
    %c0_56 = arith.constant 0 : index
    %97 = vector.load %arg7[%c0_55, %c0_56] : memref<8x16xf32, #tpu.memory_space<vmem>>, vector<8x16xf32>
    tpu.vector_store %arg7[%c0_55, %c0_56], %96 {strides = array<i32>} : memref<8x16xf32, #tpu.memory_space<vmem>>, vector<8x16xf32>,
    return
  }
  func.func @transform_0(%arg0: i32) -> (i32, i32) {
    %c0_i32 = arith.constant 0 : i32
    %c0_i32_0 = arith.constant 0 : i32
    return %arg0, %c0_i32 : i32, i32
  }
  func.func @transform_1(%arg0: i32) -> (i32, i32) {
    %c0_i32 = arith.constant 0 : i32
    %c0_i32_0 = arith.constant 0 : i32
    return %arg0, %c0_i32 : i32, i32
  }
  func.func @transform_2(%arg0: i32) -> (i32, i32, i32) {
    %c0_i32 = arith.constant 0 : i32
    %c0_i32_0 = arith.constant 0 : i32
    %c0_i32_1 = arith.constant 0 : i32
    %c0_i32_2 = arith.constant 0 : i32
    return %c0_i32, %c0_i32_0, %c0_i32_1 : i32, i32, i32
  }
  func.func @transform_3(%arg0: i32) -> (i32, i32, i32) {
    %c0_i32 = arith.constant 0 : i32
    %c0_i32_0 = arith.constant 0 : i32
    %c0_i32_1 = arith.constant 0 : i32
    %c0_i32_2 = arith.constant 0 : i32
    return %c0_i32, %c0_i32_0, %c0_i32_1 : i32, i32, i32
  }
  func.func @transform_4(%arg0: i32) -> (i32, i32) {
    %c0_i32 = arith.constant 0 : i32
    %c0_i32_0 = arith.constant 0 : i32
    %c0_i32_1 = arith.constant 0 : i32
    return %c0_i32, %c0_i32_0 : i32, i32
  }
  func.func @transform_5(%arg0: i32) -> (i32, i32) {
    %c0_i32 = arith.constant 0 : i32
    %c0_i32_0 = arith.constant 0 : i32
    return %arg0, %c0_i32 : i32, i32
  }
  func.func @transform_6(%arg0: i32) -> (i32, i32) {
    %c0_i32 = arith.constant 0 : i32
    %c0_i32_0 = arith.constant 0 : i32
    return %arg0, %c0_i32 : i32, i32
  }
  func.func @transform_7(%arg0: i32) -> (i32, i32) {
    %c0_i32 = arith.constant 0 : i32
    %c0_i32_0 = arith.constant 0 : i32
    return %arg0, %c0_i32 : i32, i32
  }
}

</mosaic_0001>

<llo_original>
// kernel: tpu_custom_call.1
$region0: #{tpu_custom_call.1}
  #allocation0 [shape = 'u32[]', space=smem, size = 0x4, offset = 0x4, fixed_abs, tag = 'smem constant byte address 0x4 - core index']
  #allocation1 [shape = 'u32[72,128]{1,0:T(1,128)}', space=vmem, size = 0x9000, scoped, tag = 'internal scratch']
  #allocation2 [shape = 'f32[8,48]{1,0:T(8,128)}', space=vmem, size = 0x1000, scoped, tag = 'scratch operand']
  %s0 = inlined_call_operand.hbm [shape: f32[8,32], index: 0, kind: input, shape index: {}]
  %s1 = inlined_call_operand.hbm [shape: f32[8,16], index: 1, kind: input, shape index: {}]
  %s2 = inlined_call_operand.hbm [shape: bf16[2,48,128], index: 2, kind: input, shape index: {}]
  %s3 = inlined_call_operand.hbm [shape: bf16[4,128,128], index: 3, kind: input, shape index: {}]
  %s4 = inlined_call_operand.hbm [shape: f32[8,128], index: 4, kind: input, shape index: {}]
  %s5 = inlined_call_operand.hbm [shape: f32[8,16], index: 5, kind: output, shape index: {0}]
  %s6 = inlined_call_operand.hbm [shape: f32[8,16], index: 6, kind: output, shape index: {1}]
  %s7 = inlined_call_operand.hbm [shape: f32[8,32], index: 7, kind: output, shape index: {2}]
  %8 = xla_tuple %s5, %s6, %s7
  %s9 = sld [smem:[#allocation0]]
  $region66: #{tpu_custom_call.1} parent=0
    _
  %s11 = ssub.s32 1, %s9
  %s12 = scalar_select 0, %s11, %s9
  $region1: #{tpu_custom_call.1} parent=0
    #allocation3 [shape = 'u8[4096]{0}', space=vmem, size = 0x1000, scoped, tag = 'input window, operand 0, single buffered']
    #allocation4 [shape = 's32[1]{0}', space=sflag, size = 0x4, scoped, tag = 'scoped memory for tpu_custom_call.1']
    #allocation5 [shape = 's32[1]{0}', space=sflag, size = 0x4, scoped, tag = 'scoped memory for tpu_custom_call.1']
    #allocation6 [shape = 'u8[4096]{0}', space=vmem, size = 0x1000, scoped, tag = 'input window, operand 1, single buffered']
    #allocation7 [shape = 's32[1]{0}', space=sflag, size = 0x4, scoped, tag = 'scoped memory for tpu_custom_call.1']
    #allocation8 [shape = 'u8[24576]{0}', space=vmem, size = 0x6000, scoped, tag = 'input window, operand 2, single buffered']
    #allocation9 [shape = 'u8[131072]{0}', space=vmem, size = 0x20000, scoped, tag = 'input window, operand 3, single buffered']
    #allocation10 [shape = 's32[1]{0}', space=sflag, size = 0x4, scoped, tag = 'scoped memory for tpu_custom_call.1']
    #allocation11 [shape = 'u8[4096]{0}', space=vmem, size = 0x1000, scoped, tag = 'input window, operand 4, single buffered']
    #allocation12 [shape = 'u8[4096]{0}', space=vmem, size = 0x1000, scoped, tag = 'output window, operand 0, single buffered']
    #allocation13 [shape = 'u8[4096]{0}', space=vmem, size = 0x1000, scoped, tag = 'output window, operand 1, single buffered']
    #allocation14 [shape = 's32[1]{0}', space=sflag, size = 0x4, scoped, tag = 'scoped memory for tpu_custom_call.1']
    #allocation15 [shape = 'u8[4096]{0}', space=vmem, size = 0x1000, scoped, tag = 'output window, operand 2, single buffered']
    %13 = vsyncpa [#allocation4], 0
    %14 = vsyncpa [#allocation7], 0
    %15 = vsyncpa [#allocation10], 0
    %16 = vsyncpa [#allocation5], 0
    %17 = vsyncpa [#allocation14], 0
    // Predicated region
    $region2: #{tpu_custom_call.1} parent=1 // pred_check
      _
    $region3: #{tpu_custom_call.1} parent=1 // pred_check_branch
      %19 = sbr.rel (0) target = $region5
    $region4: #{tpu_custom_call.1} parent=1 // pred_region
      %21 = vsyncadd [#allocation4], 0
      %s23 = sshll.u32 %s0, 4
      %s24 = int_to_ptr.hbm [resolvable:$true] %s23
      %s25 = sshll.u32 [#allocation3], 4
      %s26 = int_to_ptr.vmem [resolvable:$true] %s25
      %28 = dma.hbm_to_vmem [thread:$0]  %s24, 128, %s26, [#allocation4]
    $region5: #{tpu_custom_call.1} parent=1 // pred_fallthru
      _
    // Predicated region
    $region6: #{tpu_custom_call.1} parent=1 // pred_check
      _
    $region7: #{tpu_custom_call.1} parent=1 // pred_check_branch
      %30 = sbr.rel (0) target = $region9
    $region8: #{tpu_custom_call.1} parent=1 // pred_region
      %32 = vsyncadd [#allocation7], 0
      %s34 = sshll.u32 %s1, 4
      %s35 = int_to_ptr.hbm [resolvable:$true] %s34
      %s36 = sshll.u32 [#allocation6], 4
      %s37 = int_to_ptr.vmem [resolvable:$true] %s36
      %39 = dma.hbm_to_vmem [thread:$0]  %s35, 128, %s37, [#allocation7]
    $region9: #{tpu_custom_call.1} parent=1 // pred_fallthru
      _
    // Predicated region
    $region10: #{tpu_custom_call.1} parent=1 // pred_check
      _
    $region11: #{tpu_custom_call.1} parent=1 // pred_check_branch
      %41 = sbr.rel (0) target = $region13
    $region12: #{tpu_custom_call.1} parent=1 // pred_region
      %43 = vsyncadd [#allocation7], 0
      %s44 = sshll.u32 %s2, 4
      %s45 = int_to_ptr.hbm [resolvable:$true] %s44
      %s46 = sshll.u32 [#allocation8], 4
      %s47 = int_to_ptr.vmem [resolvable:$true] %s46
      %52 = dma.hbm_to_vmem [thread:$0]  %s45, 768, %s47, [#allocation7], 64, 64, 4
    $region13: #{tpu_custom_call.1} parent=1 // pred_fallthru
      _
    // Predicated region
    $region14: #{tpu_custom_call.1} parent=1 // pred_check
      _
    $region15: #{tpu_custom_call.1} parent=1 // pred_check_branch
      %54 = sbr.rel (0) target = $region17
    $region16: #{tpu_custom_call.1} parent=1 // pred_region
      %56 = vsyncadd [#allocation10], 0
      %s57 = sshll.u32 %s3, 4
      %s58 = int_to_ptr.hbm [resolvable:$true] %s57
      %s59 = sshll.u32 [#allocation9], 4
      %s60 = int_to_ptr.vmem [resolvable:$true] %s59
      %65 = dma.hbm_to_vmem [thread:$0]  %s58, 4096, %s60, [#allocation10], 64, 64, 4
    $region17: #{tpu_custom_call.1} parent=1 // pred_fallthru
      _
    // Predicated region
    $region18: #{tpu_custom_call.1} parent=1 // pred_check
      _
    $region19: #{tpu_custom_call.1} parent=1 // pred_check_branch
      %67 = sbr.rel (0) target = $region21
    $region20: #{tpu_custom_call.1} parent=1 // pred_region
      %69 = vsyncadd [#allocation10], 0
      %s71 = sshll.u32 %s4, 4
      %s72 = int_to_ptr.hbm [resolvable:$true] %s71
      %s73 = sshll.u32 [#allocation11], 4
      %s74 = int_to_ptr.vmem [resolvable:$true] %s73
      %76 = dma.hbm_to_vmem [thread:$0]  %s72, 128, %s74, [#allocation10]
    $region21: #{tpu_custom_call.1} parent=1 // pred_fallthru
      _
    // Predicated region
    $region22: #{tpu_custom_call.1} parent=1 // pred_check
      _
    $region23: #{tpu_custom_call.1} parent=1 // pred_check_branch
      %78 = sbr.rel (0) target = $region25
    $region24: #{tpu_custom_call.1} parent=1 // pred_region
      %80 = dma.done [#allocation4], 128
    $region25: #{tpu_custom_call.1} parent=1 // pred_fallthru
      _
    // Predicated region
    $region26: #{tpu_custom_call.1} parent=1 // pred_check
      _
    $region27: #{tpu_custom_call.1} parent=1 // pred_check_branch
      %82 = sbr.rel (0) target = $region29
    $region28: #{tpu_custom_call.1} parent=1 // pred_region
      %84 = dma.done [#allocation7], 128
    $region29: #{tpu_custom_call.1} parent=1 // pred_fallthru
      _
    // Predicated region
    $region30: #{tpu_custom_call.1} parent=1 // pred_check
      _
    $region31: #{tpu_custom_call.1} parent=1 // pred_check_branch
      %86 = sbr.rel (0) target = $region33
    $region32: #{tpu_custom_call.1} parent=1 // pred_region
      %88 = dma.done [#allocation7], 768
    $region33: #{tpu_custom_call.1} parent=1 // pred_fallthru
      _
    // Predicated region
    $region34: #{tpu_custom_call.1} parent=1 // pred_check
      _
    $region35: #{tpu_custom_call.1} parent=1 // pred_check_branch
      %90 = sbr.rel (0) target = $region37
    $region36: #{tpu_custom_call.1} parent=1 // pred_region
      %92 = dma.done [#allocation10], 4096
    $region37: #{tpu_custom_call.1} parent=1 // pred_fallthru
      _
    // Predicated region
    $region38: #{tpu_custom_call.1} parent=1 // pred_check
      _
    $region39: #{tpu_custom_call.1} parent=1 // pred_check_branch
      %94 = sbr.rel (0) target = $region41
    $region40: #{tpu_custom_call.1} parent=1 // pred_region
      %96 = dma.done [#allocation10], 128
    $region41: #{tpu_custom_call.1} parent=1 // pred_fallthru
      _
    %v98 = vld [vmem:[#allocation3] sm:$0xff]
    %vm99 = vcmask 261120
    %100 = vst.msk [vmem:[#allocation2] sm:$0xff] %vm99, %v98
    %v101 = vld [vmem:[#allocation6] sm:$0xff]
    %103 = vrot.lane.b32.xlu0 %v101, 32
    %v104 = vpop.permute.xlu0 %103
    %vm106 = vcmask 392448
    %107 = vst.msk [vmem:[#allocation2] sm:$0xff] %vm106, %v104
    %v108 = vld [vmem:[#allocation2] sm:$0xff]
    %v109 = vpack.c.bf16 %v108, %v108
    %v110 = vld [vmem:[#allocation8] sm:$0xf]
    %v111 = vld [vmem:[#allocation8 + $0x4] sm:$0xf]
    %v112 = vld [vmem:[#allocation8 + $0x8] sm:$0xf]
    %v113 = vld [vmem:[#allocation8 + $0xc] sm:$0xf]
    %v114 = vld [vmem:[#allocation8 + $0x10] sm:$0xf]
    %v115 = vld [vmem:[#allocation8 + $0x14] sm:$0xf]
    %v116 = vld [vmem:[#allocation11] sm:$0x1]
    %v117 = vperm.slane %v116, 0
    %v124 = vunpack.c.l.b16 %v110
    %v125 = vunpack.c.l.b16 %v111
    %v126 = vunpack.c.l.b16 %v112
    %v127 = vunpack.c.l.b16 %v113
    %v128 = vunpack.c.l.b16 %v114
    %v129 = vunpack.c.l.b16 %v115
    %v130 = vpack.c.b16 %v125, %v124
    %v131 = vpack.c.b16 %v127, %v126
    %v132 = vpack.c.b16 %v129, %v128
    %vm136 = vcmask 392192
    %v138 = vsel %vm136, %v109, 0
    %140 = vmatpush.bf16.msra.mxu0 0
    %141 = vmatpush.bf16.msra.mxu0 0
    %142 = vmatpush.bf16.msra.mxu0 0
    %143 = vmatpush.bf16.msra.mxu0 0
    %144 = vmatpush.bf16.msra.mxu0 0
    %145 = vmatpush.bf16.msra.mxu0 %v132
    %146 = vmatpush.bf16.msra.mxu0 %v131
    %147 = vmatpush.bf16.msra.mxu0 %v130
    %148 = vmatmul.bf16.gmra.mxu0 %v138
    %v149 = vpop.f32.mrf.mxu0
    %v150 = vadd.f32 %v117, %v149
    %v151 = vpop.f32.mrf.mxu0
    %152 = vdwg.mxu0
    %v153 = vmax.f32 %v150, 0.0
    %v154 = vpack.c.bf16 %v153, %v153
    %v155 = vld [vmem:[#allocation9] sm:$0xf]
    %v156 = vld [vmem:[#allocation9 + $0x4] sm:$0xf]
    %v157 = vld [vmem:[#allocation9 + $0x8] sm:$0xf]
    %v158 = vld [vmem:[#allocation9 + $0xc] sm:$0xf]
    %v159 = vld [vmem:[#allocation9 + $0x10] sm:$0xf]
    %v160 = vld [vmem:[#allocation9 + $0x14] sm:$0xf]
    %v161 = vld [vmem:[#allocation9 + $0x18] sm:$0xf]
    %v162 = vld [vmem:[#allocation9 + $0x1c] sm:$0xf]
    %v163 = vld [vmem:[#allocation9 + $0x20] sm:$0xf]
    %v164 = vld [vmem:[#allocation9 + $0x24] sm:$0xf]
    %v165 = vld [vmem:[#allocation9 + $0x28] sm:$0xf]
    %v166 = vld [vmem:[#allocation9 + $0x2c] sm:$0xf]
    %v167 = vld [vmem:[#allocation9 + $0x30] sm:$0xf]
    %v168 = vld [vmem:[#allocation9 + $0x34] sm:$0xf]
    %v169 = vld [vmem:[#allocation9 + $0x38] sm:$0xf]
    %v170 = vld [vmem:[#allocation9 + $0x3c] sm:$0xf]
    %v171 = vld [vmem:[#allocation11 + $0x1] sm:$0x1]
    %v172 = vperm.slane %v171, 0
    %v189 = vunpack.c.l.b16 %v155
    %v190 = vunpack.c.l.b16 %v156
    %v191 = vunpack.c.l.b16 %v157
    %v192 = vunpack.c.l.b16 %v158
    %v193 = vunpack.c.l.b16 %v159
    %v194 = vunpack.c.l.b16 %v160
    %v195 = vunpack.c.l.b16 %v161
    %v196 = vunpack.c.l.b16 %v162
    %v197 = vunpack.c.l.b16 %v163
    %v198 = vunpack.c.l.b16 %v164
    %v199 = vunpack.c.l.b16 %v165
    %v200 = vunpack.c.l.b16 %v166
    %v201 = vunpack.c.l.b16 %v167
    %v202 = vunpack.c.l.b16 %v168
    %v203 = vunpack.c.l.b16 %v169
    %v204 = vunpack.c.l.b16 %v170
    %v205 = vpack.c.b16 %v190, %v189
    %v206 = vpack.c.b16 %v192, %v191
    %v207 = vpack.c.b16 %v194, %v193
    %v208 = vpack.c.b16 %v196, %v195
    %v209 = vpack.c.b16 %v198, %v197
    %v210 = vpack.c.b16 %v200, %v199
    %v211 = vpack.c.b16 %v202, %v201
    %v212 = vpack.c.b16 %v204, %v203
    %221 = vmatpush.bf16.msra.mxu0 %v212
    %222 = vmatpush.bf16.msra.mxu0 %v211
    %223 = vmatpush.bf16.msra.mxu0 %v210
    %224 = vmatpush.bf16.msra.mxu0 %v209
    %225 = vmatpush.bf16.msra.mxu0 %v208
    %226 = vmatpush.bf16.msra.mxu0 %v207
    %227 = vmatpush.bf16.msra.mxu0 %v206
    %228 = vmatpush.bf16.msra.mxu0 %v205
    %229 = vmatmul.bf16.gmra.mxu0 %v154
    %v230 = vpop.f32.mrf.mxu0
    %v231 = vadd.f32 %v172, %v230
    %v232 = vpop.f32.mrf.mxu0
    %233 = vdwg.mxu0
    %v234 = vmax.f32 %v231, 0.0
    %v235 = vpack.c.bf16 %v234, %v234
    %s236 = scalar_lea.vmem [#allocation9], 64
    %v237 = vld [vmem:[%s236] sm:$0xf]
    %v238 = vld [vmem:[%s236 + $0x4] sm:$0xf]
    %v239 = vld [vmem:[%s236 + $0x8] sm:$0xf]
    %v240 = vld [vmem:[%s236 + $0xc] sm:$0xf]
    %v241 = vld [vmem:[%s236 + $0x10] sm:$0xf]
    %v242 = vld [vmem:[%s236 + $0x14] sm:$0xf]
    %v243 = vld [vmem:[%s236 + $0x18] sm:$0xf]
    %v244 = vld [vmem:[%s236 + $0x1c] sm:$0xf]
    %v245 = vld [vmem:[%s236 + $0x20] sm:$0xf]
    %v246 = vld [vmem:[%s236 + $0x24] sm:$0xf]
    %v247 = vld [vmem:[%s236 + $0x28] sm:$0xf]
    %v248 = vld [vmem:[%s236 + $0x2c] sm:$0xf]
    %v249 = vld [vmem:[%s236 + $0x30] sm:$0xf]
    %v250 = vld [vmem:[%s236 + $0x34] sm:$0xf]
    %v251 = vld [vmem:[%s236 + $0x38] sm:$0xf]
    %v252 = vld [vmem:[%s236 + $0x3c] sm:$0xf]
    %v253 = vld [vmem:[#allocation11 + $0x2] sm:$0x1]
    %v254 = vperm.slane %v253, 0
    %v271 = vunpack.c.l.b16 %v237
    %v272 = vunpack.c.l.b16 %v238
    %v273 = vunpack.c.l.b16 %v239
    %v274 = vunpack.c.l.b16 %v240
    %v275 = vunpack.c.l.b16 %v241
    %v276 = vunpack.c.l.b16 %v242
    %v277 = vunpack.c.l.b16 %v243
    %v278 = vunpack.c.l.b16 %v244
    %v279 = vunpack.c.l.b16 %v245
    %v280 = vunpack.c.l.b16 %v246
    %v281 = vunpack.c.l.b16 %v247
    %v282 = vunpack.c.l.b16 %v248
    %v283 = vunpack.c.l.b16 %v249
    %v284 = vunpack.c.l.b16 %v250
    %v285 = vunpack.c.l.b16 %v251
    %v286 = vunpack.c.l.b16 %v252
    %v287 = vpack.c.b16 %v272, %v271
    %v288 = vpack.c.b16 %v274, %v273
    %v289 = vpack.c.b16 %v276, %v275
    %v290 = vpack.c.b16 %v278, %v277
    %v291 = vpack.c.b16 %v280, %v279
    %v292 = vpack.c.b16 %v282, %v281
    %v293 = vpack.c.b16 %v284, %v283
    %v294 = vpack.c.b16 %v286, %v285
    %303 = vmatpush.bf16.msra.mxu0 %v294
    %304 = vmatpush.bf16.msra.mxu0 %v293
    %305 = vmatpush.bf16.msra.mxu0 %v292
    %306 = vmatpush.bf16.msra.mxu0 %v291
    %307 = vmatpush.bf16.msra.mxu0 %v290
    %308 = vmatpush.bf16.msra.mxu0 %v289
    %309 = vmatpush.bf16.msra.mxu0 %v288
    %310 = vmatpush.bf16.msra.mxu0 %v287
    %311 = vmatmul.bf16.gmra.mxu0 %v235
    %v312 = vpop.f32.mrf.mxu0
    %v313 = vadd.f32 %v254, %v312
    %v314 = vpop.f32.mrf.mxu0
    %315 = vdwg.mxu0
    %v316 = vlaneseq
    %v317 = vand.u32 %v316, 127
    %vm318 = vcmp.lt.s32.totalorder %v317, 16
    %v319 = vsel %vm318, %v313, -inf
    %320 = vmax.xlane.f32.xlu0 %v319
    %v321 = vpop.xlane.xlu0 %320
    %v322 = vsub.f32 %v319, %v321
    %v323 = vmul.f32 %v322, 1.442695
    %v324 = vpow.pop %v323
    %325 = vadd.xlane.f32.xlu0 %v324
    %v326 = vpop.xlane.xlu0 %325
    %v327 = vrcp.pop %v326
    %v328 = vmul.f32 %v326, %v327
    %v329 = vsub.f32 2.0, %v328
    %v330 = vmul.f32 %v327, %v329
    %v331 = vmul.f32 %v324, %v330
    %vm332 = vcmask 130048
    %333 = vst.msk [vmem:[#allocation12] sm:$0xff] %vm332, %v331
    %s334 = scalar_lea.vmem [#allocation8], 24
    %v335 = vld [vmem:[%s334] sm:$0xf]
    %v336 = vld [vmem:[%s334 + $0x4] sm:$0xf]
    %v337 = vld [vmem:[%s334 + $0x8] sm:$0xf]
    %v338 = vld [vmem:[%s334 + $0xc] sm:$0xf]
    %v339 = vld [vmem:[%s334 + $0x10] sm:$0xf]
    %v340 = vld [vmem:[%s334 + $0x14] sm:$0xf]
    %v341 = vld [vmem:[#allocation11 + $0x3] sm:$0x1]
    %v342 = vperm.slane %v341, 0
    %v349 = vunpack.c.l.b16 %v335
    %v350 = vunpack.c.l.b16 %v336
    %v351 = vunpack.c.l.b16 %v337
    %v352 = vunpack.c.l.b16 %v338
    %v353 = vunpack.c.l.b16 %v339
    %v354 = vunpack.c.l.b16 %v340
    %v355 = vpack.c.b16 %v350, %v349
    %v356 = vpack.c.b16 %v352, %v351
    %v357 = vpack.c.b16 %v354, %v353
    %361 = vmatpush.bf16.msra.mxu0 0
    %362 = vmatpush.bf16.msra.mxu0 0
    %363 = vmatpush.bf16.msra.mxu0 0
    %364 = vmatpush.bf16.msra.mxu0 0
    %365 = vmatpush.bf16.msra.mxu0 0
    %366 = vmatpush.bf16.msra.mxu0 %v357
    %367 = vmatpush.bf16.msra.mxu0 %v356
    %368 = vmatpush.bf16.msra.mxu0 %v355
    %369 = vmatmul.bf16.gmra.mxu0 %v138
    %v370 = vpop.f32.mrf.mxu0
    %v371 = vadd.f32 %v342, %v370
    %v372 = vpop.f32.mrf.mxu0
    %373 = vdwg.mxu0
    %v374 = vmax.f32 %v371, 0.0
    %v375 = vpack.c.bf16 %v374, %v374
    %s376 = scalar_lea.vmem [#allocation9], 128
    %v377 = vld [vmem:[%s376] sm:$0xf]
    %v378 = vld [vmem:[%s376 + $0x4] sm:$0xf]
    %v379 = vld [vmem:[%s376 + $0x8] sm:$0xf]
    %v380 = vld [vmem:[%s376 + $0xc] sm:$0xf]
    %v381 = vld [vmem:[%s376 + $0x10] sm:$0xf]
    %v382 = vld [vmem:[%s376 + $0x14] sm:$0xf]
    %v383 = vld [vmem:[%s376 + $0x18] sm:$0xf]
    %v384 = vld [vmem:[%s376 + $0x1c] sm:$0xf]
    %v385 = vld [vmem:[%s376 + $0x20] sm:$0xf]
    %v386 = vld [vmem:[%s376 + $0x24] sm:$0xf]
    %v387 = vld [vmem:[%s376 + $0x28] sm:$0xf]
    %v388 = vld [vmem:[%s376 + $0x2c] sm:$0xf]
    %v389 = vld [vmem:[%s376 + $0x30] sm:$0xf]
    %v390 = vld [vmem:[%s376 + $0x34] sm:$0xf]
    %v391 = vld [vmem:[%s376 + $0x38] sm:$0xf]
    %v392 = vld [vmem:[%s376 + $0x3c] sm:$0xf]
    %v393 = vld [vmem:[#allocation11 + $0x4] sm:$0x1]
    %v394 = vperm.slane %v393, 0
    %v411 = vunpack.c.l.b16 %v377
    %v412 = vunpack.c.l.b16 %v378
    %v413 = vunpack.c.l.b16 %v379
    %v414 = vunpack.c.l.b16 %v380
    %v415 = vunpack.c.l.b16 %v381
    %v416 = vunpack.c.l.b16 %v382
    %v417 = vunpack.c.l.b16 %v383
    %v418 = vunpack.c.l.b16 %v384
    %v419 = vunpack.c.l.b16 %v385
    %v420 = vunpack.c.l.b16 %v386
    %v421 = vunpack.c.l.b16 %v387
    %v422 = vunpack.c.l.b16 %v388
    %v423 = vunpack.c.l.b16 %v389
    %v424 = vunpack.c.l.b16 %v390
    %v425 = vunpack.c.l.b16 %v391
    %v426 = vunpack.c.l.b16 %v392
    %v427 = vpack.c.b16 %v412, %v411
    %v428 = vpack.c.b16 %v414, %v413
    %v429 = vpack.c.b16 %v416, %v415
    %v430 = vpack.c.b16 %v418, %v417
    %v431 = vpack.c.b16 %v420, %v419
    %v432 = vpack.c.b16 %v422, %v421
    %v433 = vpack.c.b16 %v424, %v423
    %v434 = vpack.c.b16 %v426, %v425
    %443 = vmatpush.bf16.msra.mxu0 %v434
    %444 = vmatpush.bf16.msra.mxu0 %v433
    %445 = vmatpush.bf16.msra.mxu0 %v432
    %446 = vmatpush.bf16.msra.mxu0 %v431
    %447 = vmatpush.bf16.msra.mxu0 %v430
    %448 = vmatpush.bf16.msra.mxu0 %v429
    %449 = vmatpush.bf16.msra.mxu0 %v428
    %450 = vmatpush.bf16.msra.mxu0 %v427
    %451 = vmatmul.bf16.gmra.mxu0 %v375
    %v452 = vpop.f32.mrf.mxu0
    %v453 = vadd.f32 %v394, %v452
    %v454 = vpop.f32.mrf.mxu0
    %455 = vdwg.mxu0
    %v456 = vmax.f32 %v453, 0.0
    %457 = vst.msk [vmem:[#allocation15] sm:$0xff] %vm99, %v456
    %v458 = vpack.c.bf16 %v456, %v456
    %s459 = scalar_lea.vmem [#allocation9], 192
    %v460 = vld [vmem:[%s459] sm:$0xf]
    %v461 = vld [vmem:[%s459 + $0x4] sm:$0xf]
    %v462 = vld [vmem:[%s459 + $0x8] sm:$0xf]
    %v463 = vld [vmem:[%s459 + $0xc] sm:$0xf]
    %v464 = vld [vmem:[%s459 + $0x10] sm:$0xf]
    %v465 = vld [vmem:[%s459 + $0x14] sm:$0xf]
    %v466 = vld [vmem:[%s459 + $0x18] sm:$0xf]
    %v467 = vld [vmem:[%s459 + $0x1c] sm:$0xf]
    %v468 = vld [vmem:[%s459 + $0x20] sm:$0xf]
    %v469 = vld [vmem:[%s459 + $0x24] sm:$0xf]
    %v470 = vld [vmem:[%s459 + $0x28] sm:$0xf]
    %v471 = vld [vmem:[%s459 + $0x2c] sm:$0xf]
    %v472 = vld [vmem:[%s459 + $0x30] sm:$0xf]
    %v473 = vld [vmem:[%s459 + $0x34] sm:$0xf]
    %v474 = vld [vmem:[%s459 + $0x38] sm:$0xf]
    %v475 = vld [vmem:[%s459 + $0x3c] sm:$0xf]
    %v476 = vld [vmem:[#allocation11 + $0x5] sm:$0x1]
    %v477 = vperm.slane %v476, 0
    %v494 = vunpack.c.l.b16 %v460
    %v495 = vunpack.c.l.b16 %v461
    %v496 = vunpack.c.l.b16 %v462
    %v497 = vunpack.c.l.b16 %v463
    %v498 = vunpack.c.l.b16 %v464
    %v499 = vunpack.c.l.b16 %v465
    %v500 = vunpack.c.l.b16 %v466
    %v501 = vunpack.c.l.b16 %v467
    %v502 = vunpack.c.l.b16 %v468
    %v503 = vunpack.c.l.b16 %v469
    %v504 = vunpack.c.l.b16 %v470
    %v505 = vunpack.c.l.b16 %v471
    %v506 = vunpack.c.l.b16 %v472
    %v507 = vunpack.c.l.b16 %v473
    %v508 = vunpack.c.l.b16 %v474
    %v509 = vunpack.c.l.b16 %v475
    %v510 = vpack.c.b16 %v495, %v494
    %v511 = vpack.c.b16 %v497, %v496
    %v512 = vpack.c.b16 %v499, %v498
    %v513 = vpack.c.b16 %v501, %v500
    %v514 = vpack.c.b16 %v503, %v502
    %v515 = vpack.c.b16 %v505, %v504
    %v516 = vpack.c.b16 %v507, %v506
    %v517 = vpack.c.b16 %v509, %v508
    %526 = vmatpush.bf16.msra.mxu0 %v517
    %527 = vmatpush.bf16.msra.mxu0 %v516
    %528 = vmatpush.bf16.msra.mxu0 %v515
    %529 = vmatpush.bf16.msra.mxu0 %v514
    %530 = vmatpush.bf16.msra.mxu0 %v513
    %531 = vmatpush.bf16.msra.mxu0 %v512
    %532 = vmatpush.bf16.msra.mxu0 %v511
    %533 = vmatpush.bf16.msra.mxu0 %v510
    %534 = vmatmul.bf16.gmra.mxu0 %v458
    %v535 = vpop.f32.mrf.mxu0
    %v536 = vadd.f32 %v477, %v535
    %v537 = vpop.f32.mrf.mxu0
    %538 = vdwg.mxu0
    %v539 = vsel %vm318, %v536, -inf
    %540 = vmax.xlane.f32.xlu0 %v539
    %v541 = vpop.xlane.xlu0 %540
    %v542 = vsub.f32 %v539, %v541
    %v543 = vmul.f32 %v542, 1.442695
    %v544 = vpow.pop %v543
    %545 = vadd.xlane.f32.xlu0 %v544
    %v546 = vpop.xlane.xlu0 %545
    %v547 = vrcp.pop %v546
    %v548 = vmul.f32 %v546, %v547
    %v549 = vsub.f32 2.0, %v548
    %v550 = vmul.f32 %v547, %v549
    %v551 = vmul.f32 %v544, %v550
    %552 = vst.msk [vmem:[#allocation13] sm:$0xff] %vm332, %v551
    // Predicated region
    $region42: #{tpu_custom_call.1} parent=1 // pred_check
      _
    $region43: #{tpu_custom_call.1} parent=1 // pred_check_branch
      %554 = sbr.rel (0) target = $region45
    $region44: #{tpu_custom_call.1} parent=1 // pred_region
      %556 = vsyncadd [#allocation5], 0
      %s558 = sshll.u32 [#allocation12], 4
      %s559 = int_to_ptr.vmem [resolvable:$true] %s558
      %s560 = sshll.u32 %s5, 4
      %s561 = int_to_ptr.hbm [resolvable:$true] %s560
      %563 = dma.vmem_to_hbm [thread:$0]  %s559, 128, %s561, [#allocation5]
    $region45: #{tpu_custom_call.1} parent=1 // pred_fallthru
      _
    // Predicated region
    $region46: #{tpu_custom_call.1} parent=1 // pred_check
      _
    $region47: #{tpu_custom_call.1} parent=1 // pred_check_branch
      %565 = sbr.rel (0) target = $region49
    $region48: #{tpu_custom_call.1} parent=1 // pred_region
      %567 = vsyncadd [#allocation14], 0
      %s569 = sshll.u32 [#allocation13], 4
      %s570 = int_to_ptr.vmem [resolvable:$true] %s569
      %s571 = sshll.u32 %s6, 4
      %s572 = int_to_ptr.hbm [resolvable:$true] %s571
      %574 = dma.vmem_to_hbm [thread:$0]  %s570, 128, %s572, [#allocation14]
    $region49: #{tpu_custom_call.1} parent=1 // pred_fallthru
      _
    // Predicated region
    $region50: #{tpu_custom_call.1} parent=1 // pred_check
      _
    $region51: #{tpu_custom_call.1} parent=1 // pred_check_branch
      %576 = sbr.rel (0) target = $region53
    $region52: #{tpu_custom_call.1} parent=1 // pred_region
      %578 = vsyncadd [#allocation14], 0
      %s580 = sshll.u32 [#allocation15], 4
      %s581 = int_to_ptr.vmem [resolvable:$true] %s580
      %s582 = sshll.u32 %s7, 4
      %s583 = int_to_ptr.hbm [resolvable:$true] %s582
      %585 = dma.vmem_to_hbm [thread:$0]  %s581, 128, %s583, [#allocation14]
    $region53: #{tpu_custom_call.1} parent=1 // pred_fallthru
      _
    // Predicated region
    $region54: #{tpu_custom_call.1} parent=1 // pred_check
      _
    $region55: #{tpu_custom_call.1} parent=1 // pred_check_branch
      %587 = sbr.rel (0) target = $region57
    $region56: #{tpu_custom_call.1} parent=1 // pred_region
      %589 = dma.done [#allocation5], 128
    $region57: #{tpu_custom_call.1} parent=1 // pred_fallthru
      _
    // Predicated region
    $region58: #{tpu_custom_call.1} parent=1 // pred_check
      _
    $region59: #{tpu_custom_call.1} parent=1 // pred_check_branch
      %591 = sbr.rel (0) target = $region61
    $region60: #{tpu_custom_call.1} parent=1 // pred_region
      %593 = dma.done [#allocation14], 128
    $region61: #{tpu_custom_call.1} parent=1 // pred_fallthru
      _
    // Predicated region
    $region62: #{tpu_custom_call.1} parent=1 // pred_check
      _
    $region63: #{tpu_custom_call.1} parent=1 // pred_check_branch
      %595 = sbr.rel (0) target = $region65
    $region64: #{tpu_custom_call.1} parent=1 // pred_region
      %597 = dma.done [#allocation14], 128
    $region65: #{tpu_custom_call.1} parent=1 // pred_fallthru
      _
    %598 = vsyncpa [#allocation4], 1
    %599 = vsyncpa [#allocation7], 1
    %600 = vsyncpa [#allocation10], 1
    %601 = vsyncpa [#allocation5], 1
    %602 = vsyncpa [#allocation14], 1

</llo_original>
